<compile_context>
chip_gen: v5e
topology: v5e:2x2
jax: 0.10.0
libtpu: 0.0.40
codegen_flags: <defaults>
</compile_context>

<pallas_src>
import jax
import jax.numpy as jnp
from jax.experimental import pallas as pl
from jax.experimental.pallas import tpu as pltpu


def _round_up(x, m):
    return ((x + m - 1) // m) * m


def gates_kernel(pos_ref, hid_ref, out_st_ref, w_ref, b_ref, o_ref,
                 old_g_ref, new_g_ref):
    # pos_ref:    (tm, P)        position rows (same block for all j)
    # hid_ref:    (tm, tn)       hidden-state tile
    # out_st_ref: (tm, tn)       output-state tile
    # w_ref:      (P, 2)   f32   col 0 = old_v weight, col 1 = new_v weight
    # b_ref:      (2,)     f32   SMEM scalars [b_old, b_new]
    # o_ref:      (tm, tn)
    # old_g_ref / new_g_ref: (tm, 1) f32 VMEM scratch (gate cache per row tile)

    # Gates depend only on the row tile -> compute once (j == 0) and reuse
    # across all H tiles of this row tile.
    @pl.when(pl.program_id(1) == 0)
    def _():
        pos = pos_ref[...].astype(jnp.float32)
        g = jnp.dot(pos, w_ref[...], preferred_element_type=jnp.float32)  # (tm, 2)
        old_g_ref[...] = jnp.tanh(g[:, 0:1] + b_ref[0])
        new_g_ref[...] = jnp.tanh(g[:, 1:2] + b_ref[1])

    dt = hid_ref.dtype
    old_g = old_g_ref[...].astype(dt)   # (tm, 1) broadcasts over tn
    new_g = new_g_ref[...].astype(dt)
    o_ref[...] = (old_g * hid_ref[...] + new_g * out_st_ref[...]).astype(o_ref.dtype)


def gates_forward(hidden_states, output_states, position,
                  w_old, b_old, w_new, b_new,
                  *, tm=None, tn=None,
                  vmem_limit_bytes=None, vmem_budget_bytes=None):
    """hidden_states/output_states: [B, S, H]; position: [B, S, P].
    w_old/w_new: [P, 1]; b_old/b_new: [1]. Returns [B, S, H]."""
    B, S, H = hidden_states.shape
    P = position.shape[-1]
    N = B * S

    act_dtype = hidden_states.dtype
    act_bytes = jnp.dtype(act_dtype).itemsize
    pos_bytes = jnp.dtype(position.dtype).itemsize

    # --- VMEM limits: leave headroom below physical VMEM (v7x = 64 MiB/TC).
    if vmem_limit_bytes is None:
        try:
            cap = pltpu.get_tpu_info().vmem_capacity_bytes
            vmem_limit_bytes = min(int(cap * 0.8), 100 * 1024 * 1024)
        except Exception:
            vmem_limit_bytes = 48 * 1024 * 1024
    if vmem_budget_bytes is None:
        vmem_budget_bytes = int(vmem_limit_bytes * 0.7)

    # --- Lane-dense column tile: a multiple of 128. No wrapper-side padding;
    # the H tail (if any) is a masked edge block.
    if tn is None:
        tn = min(512, _round_up(H, 128))
    assert tn % 128 == 0

    # --- Row tile from the VMEM budget (double-buffered streams), aligned to
    # the sublane packing of the activation dtype.
    row_align = {4: 8, 2: 16, 1: 32}.get(act_bytes, 8)
    if tm is None:
        per_row = 2 * (P * pos_bytes + 3 * tn * act_bytes)
        tm_cap = max(row_align,
                     (vmem_budget_bytes // per_row) // row_align * row_align)
        tm = int(min(_round_up(N, row_align), tm_cap, 4096))
        tm = max(tm, row_align)
        # Megacore (v7x has 2 TCs): ensure >= 2 tiles on the parallel row axis
        # whenever the row count allows it.
        if N <= tm and N >= 2 * row_align:
            tm = _round_up((N + 1) // 2, row_align)
    assert tm % 8 == 0

    # --- Flatten to rows; no padding, no output slicing.
    pos2d = position.reshape(N, P)
    hid2d = hidden_states.reshape(N, H)
    out2d = output_states.reshape(N, H)

    # --- Pack the two Conv1D layers: (P, 2) weight resident in VMEM,
    # (2,) bias scalars in SMEM.
    w_packed = jnp.concatenate([w_old, w_new], axis=1).astype(jnp.float32)
    b_packed = jnp.concatenate(
        [b_old.reshape(1), b_new.reshape(1)], axis=0).astype(jnp.float32)

    # Grid: rows outer ("parallel", megacore-sharded), H tiles inner
    # ("arbitrary" so the per-row-tile gate cache is valid on each core).
    grid = (pl.cdiv(N, tm), pl.cdiv(H, tn))

    cost = pl.CostEstimate(
        flops=2 * N * P * 2 + 3 * N * H,
        transcendentals=2 * N,
        bytes_accessed=3 * N * H * act_bytes + N * P * pos_bytes + (P * 2 + 2) * 4,
    )

    result = pl.pallas_call(
        gates_kernel,
        out_shape=jax.ShapeDtypeStruct((N, H), act_dtype),
        grid_spec=pltpu.PrefetchScalarGridSpec(
            num_scalar_prefetch=0,
            grid=grid,
            in_specs=[
                pl.BlockSpec((tm, P), lambda i, j: (i, 0)),      # position rows
                pl.BlockSpec((tm, tn), lambda i, j: (i, j)),     # hidden tile
                pl.BlockSpec((tm, tn), lambda i, j: (i, j)),     # output-states tile
                pl.BlockSpec((P, 2), lambda i, j: (0, 0)),       # packed weight (resident)
                pl.BlockSpec(memory_space=pltpu.MemorySpace.SMEM),  # packed bias scalars
            ],
            out_specs=pl.BlockSpec((tm, tn), lambda i, j: (i, j)),
            scratch_shapes=[pltpu.VMEM((tm, 1), jnp.float32),    # cached old gate
                            pltpu.VMEM((tm, 1), jnp.float32)],   # cached new gate
        ),
        compiler_params=pltpu.CompilerParams(
            dimension_semantics=("parallel", "arbitrary"),
            vmem_limit_bytes=vmem_limit_bytes,
        ),
        cost_estimate=cost,
    )(pos2d, hid2d, out2d, w_packed, b_packed)

    return result.reshape(B, S, H)


def gates_reference(hidden_states, output_states, position, w_old, b_old, w_new, b_new):
    old_gate = jnp.tanh(position @ w_old + b_old)   # [..., 1]
    new_gate = jnp.tanh(position @ w_new + b_new)   # [..., 1]
    return old_gate * hidden_states + new_gate * output_states


if __name__ == "__main__":
    key = jax.random.PRNGKey(0)
    k_h, k_o, k_p, k_wo, k_wn = jax.random.split(key, 5)

    # --- Test 1: small f32 case (exact match vs reference) -----------------
    B, S, H = 2, 8, 32          # batch, seq, hidden size
    P = 32                      # config.position_dim

    hidden_states = jax.random.normal(k_h, (B, S, H), dtype=jnp.float32)
    output_states = jax.random.normal(k_o, (B, S, H), dtype=jnp.float32)
    position = jax.random.normal(k_p, (B, S, P), dtype=jnp.float32)

    # Conv1D params: weight (nx=P, nf=1) ~ N(0, 0.02); nonzero biases to
    # exercise the SMEM bias path.
    w_old = 0.02 * jax.random.normal(k_wo, (P, 1), dtype=jnp.float32)
    b_old = jnp.full((1,), 0.10, dtype=jnp.float32)
    w_new = 0.02 * jax.random.normal(k_wn, (P, 1), dtype=jnp.float32)
    b_new = jnp.full((1,), -0.05, dtype=jnp.float32)

    out = gates_forward(hidden_states, output_states, position,
                        w_old, b_old, w_new, b_new)
    out = jax.block_until_ready(out)

    ref = gates_reference(hidden_states, output_states, position,
                          w_old, b_old, w_new, b_new)
    assert out.shape == (B, S, H)
    assert jnp.allclose(out, ref, atol=1e-5, rtol=1e-5), "mismatch vs reference (f32)"

    # --- Test 2: ragged rows + multi-H-tile + bf16 blend --------------------
    k2 = jax.random.PRNGKey(1)
    k_h2, k_o2, k_p2, k_wo2, k_wn2 = jax.random.split(k2, 5)
    B2, S2, H2, P2 = 2, 9, 160, 32   # N=18 rows (ragged vs tm=16), 2 H tiles at tn=128

    hs2 = jax.random.normal(k_h2, (B2, S2, H2), dtype=jnp.float32).astype(jnp.bfloat16)
    os2 = jax.random.normal(k_o2, (B2, S2, H2), dtype=jnp.float32).astype(jnp.bfloat16)
    pos2 = jax.random.normal(k_p2, (B2, S2, P2), dtype=jnp.float32)
    w_old2 = 0.02 * jax.random.normal(k_wo2, (P2, 1), dtype=jnp.float32)
    b_old2 = jnp.full((1,), 0.20, dtype=jnp.float32)
    w_new2 = 0.02 * jax.random.normal(k_wn2, (P2, 1), dtype=jnp.float32)
    b_new2 = jnp.full((1,), -0.10, dtype=jnp.float32)

    out2 = gates_forward(hs2, os2, pos2, w_old2, b_old2, w_new2, b_new2,
                         tm=16, tn=128)
    out2 = jax.block_until_ready(out2)

    ref2 = gates_reference(hs2.astype(jnp.float32), os2.astype(jnp.float32), pos2,
                           w_old2, b_old2, w_new2, b_new2)
    assert out2.shape == (B2, S2, H2)
    assert out2.dtype == jnp.bfloat16
    assert jnp.allclose(out2.astype(jnp.float32), ref2, atol=5e-2, rtol=5e-2), \
        "mismatch vs reference (bf16 / ragged)"

    print("KERNEL_OK")
</pallas_src>

<mosaic_0001>
module attributes {stable_mosaic.version = 11 : i64} {
  func.func @gates_kernel(%arg0: i32, %arg1: i32, %arg2: memref<8x32xf32, #tpu.memory_space<vmem>>, %arg3: memref<8x128xf32, #tpu.memory_space<vmem>>, %arg4: memref<8x128xf32, #tpu.memory_space<vmem>>, %arg5: memref<32x2xf32, #tpu.memory_space<vmem>>, %arg6: memref<2xf32, #tpu.memory_space<smem>>, %arg7: memref<8x128xf32, #tpu.memory_space<vmem>>, %arg8: memref<8x1xf32, #tpu.memory_space<vmem>>, %arg9: memref<8x1xf32, #tpu.memory_space<vmem>>) attributes {dimension_semantics = [#tpu.dimension_semantics<parallel>, #tpu.dimension_semantics<arbitrary>], iteration_bounds = array<i64: 2, 1>, scalar_prefetch = 0 : i64, scratch_operands = 2 : i64, tpu.core_type = #tpu.core_type<tc>, window_params = [{transform_indices = @transform_0, window_bounds = array<i64: 8, 32>}, {transform_indices = @transform_1, window_bounds = array<i64: 8, 128>}, {transform_indices = @transform_2, window_bounds = array<i64: 8, 128>}, {pipeline_mode = #tpu.pipeline_mode<synchronous>, transform_indices = @transform_3, window_bounds = array<i64: 32, 2>}, {transform_indices = @transform_4, window_bounds = array<i64: 2>}, {transform_indices = @transform_5, window_bounds = array<i64: 8, 128>}]} {
    %c0_i32 = arith.constant 0 : i32
    %0 = arith.cmpi eq, %arg1, %c0_i32 : i32
    %1 = arith.extui %0 : i1 to i32
    %c0_i32_0 = arith.constant 0 : i32
    %2 = arith.cmpi ne, %1, %c0_i32_0 : i32
    scf.if %2 {
      %c0_10 = arith.constant 0 : index
      %c0_11 = arith.constant 0 : index
      %13 = vector.load %arg2[%c0_10, %c0_11] : memref<8x32xf32, #tpu.memory_space<vmem>>, vector<8x32xf32>
      %c0_12 = arith.constant 0 : index
      %c0_13 = arith.constant 0 : index
      %14 = vector.load %arg5[%c0_12, %c0_13] : memref<32x2xf32, #tpu.memory_space<vmem>>, vector<32x2xf32>
      %cst = arith.constant dense<0.000000e+00> : vector<8x2xf32>
      %15 = tpu.matmul %13, %14, %cst {dimension_numbers = #tpu.dot_dimension_numbers<[1], [0], [0], [1], [0, 0, 1, 1], [], []>} : vector<8x32xf32>, vector<32x2xf32>, vector<8x2xf32> -> vector<8x2xf32>
      %16 = vector.extract_strided_slice %15 {offsets = [0, 0], sizes = [8, 1], strides = [1, 1]} : vector<8x2xf32> to vector<8x1xf32>
      %c0_14 = arith.constant 0 : index
      %17 = memref.load %arg6[%c0_14] : memref<2xf32, #tpu.memory_space<smem>>
      %18 = vector.broadcast %17 : f32 to vector<8x1xf32>
      %19 = arith.addf %16, %18 : vector<8x1xf32>
      %20 = math.tanh %19 : vector<8x1xf32>
      %c0_15 = arith.constant 0 : index
      %c0_16 = arith.constant 0 : index
      %21 = vector.load %arg8[%c0_15, %c0_16] : memref<8x1xf32, #tpu.memory_space<vmem>>, vector<8x1xf32>
      tpu.vector_store %arg8[%c0_15, %c0_16], %20 {strides = array<i32>} : memref<8x1xf32, #tpu.memory_space<vmem>>, vector<8x1xf32>,
      %22 = vector.extract_strided_slice %15 {offsets = [0, 1], sizes = [8, 1], strides = [1, 1]} : vector<8x2xf32> to vector<8x1xf32>
      %c1 = arith.constant 1 : index
      %23 = memref.load %arg6[%c1] : memref<2xf32, #tpu.memory_space<smem>>
      %24 = vector.broadcast %23 : f32 to vector<8x1xf32>
      %25 = arith.addf %22, %24 : vector<8x1xf32>
      %26 = math.tanh %25 : vector<8x1xf32>
      %c0_17 = arith.constant 0 : index
      %c0_18 = arith.constant 0 : index
      %27 = vector.load %arg9[%c0_17, %c0_18] : memref<8x1xf32, #tpu.memory_space<vmem>>, vector<8x1xf32>
      tpu.vector_store %arg9[%c0_17, %c0_18], %26 {strides = array<i32>} : memref<8x1xf32, #tpu.memory_space<vmem>>, vector<8x1xf32>,
    } else {
    }
    %c0 = arith.constant 0 : index
    %c0_1 = arith.constant 0 : index
    %3 = vector.load %arg8[%c0, %c0_1] : memref<8x1xf32, #tpu.memory_space<vmem>>, vector<8x1xf32>
    %c0_2 = arith.constant 0 : index
    %c0_3 = arith.constant 0 : index
    %4 = vector.load %arg9[%c0_2, %c0_3] : memref<8x1xf32, #tpu.memory_space<vmem>>, vector<8x1xf32>
    %c0_4 = arith.constant 0 : index
    %c0_5 = arith.constant 0 : index
    %5 = vector.load %arg3[%c0_4, %c0_5] : memref<8x128xf32, #tpu.memory_space<vmem>>, vector<8x128xf32>
    %6 = vector.broadcast %3 : vector<8x1xf32> to vector<8x128xf32>
    %7 = arith.mulf %6, %5 : vector<8x128xf32>
    %c0_6 = arith.constant 0 : index
    %c0_7 = arith.constant 0 : index
    %8 = vector.load %arg4[%c0_6, %c0_7] : memref<8x128xf32, #tpu.memory_space<vmem>>, vector<8x128xf32>
    %9 = vector.broadcast %4 : vector<8x1xf32> to vector<8x128xf32>
    %10 = arith.mulf %9, %8 : vector<8x128xf32>
    %11 = arith.addf %7, %10 : vector<8x128xf32>
    %c0_8 = arith.constant 0 : index
    %c0_9 = arith.constant 0 : index
    %12 = vector.load %arg7[%c0_8, %c0_9] : memref<8x128xf32, #tpu.memory_space<vmem>>, vector<8x128xf32>
    tpu.vector_store %arg7[%c0_8, %c0_9], %11 {strides = array<i32>} : memref<8x128xf32, #tpu.memory_space<vmem>>, vector<8x128xf32>,
    return
  }
  func.func @transform_0(%arg0: i32, %arg1: i32) -> (i32, i32) {
    %c0_i32 = arith.constant 0 : i32
    %c0_i32_0 = arith.constant 0 : i32
    return %arg0, %c0_i32 : i32, i32
  }
  func.func @transform_1(%arg0: i32, %arg1: i32) -> (i32, i32) {
    %c0_i32 = arith.constant 0 : i32
    return %arg0, %arg1 : i32, i32
  }
  func.func @transform_2(%arg0: i32, %arg1: i32) -> (i32, i32) {
    %c0_i32 = arith.constant 0 : i32
    return %arg0, %arg1 : i32, i32
  }
  func.func @transform_3(%arg0: i32, %arg1: i32) -> (i32, i32) {
    %c0_i32 = arith.constant 0 : i32
    %c0_i32_0 = arith.constant 0 : i32
    %c0_i32_1 = arith.constant 0 : i32
    return %c0_i32, %c0_i32_0 : i32, i32
  }
  func.func @transform_4(%arg0: i32, %arg1: i32) -> i32 {
    %c0_i32 = arith.constant 0 : i32
    %c0_i32_0 = arith.constant 0 : i32
    return %c0_i32 : i32
  }
  func.func @transform_5(%arg0: i32, %arg1: i32) -> (i32, i32) {
    %c0_i32 = arith.constant 0 : i32
    return %arg0, %arg1 : i32, i32
  }
}

</mosaic_0001>

<llo_original>
// kernel: tpu_custom_call.1
$region0: #{tpu_custom_call.1}
  #allocation0 [shape = 'u32[]', space=smem, size = 0x4, offset = 0x4, fixed_abs, tag = 'smem constant byte address 0x4 - core index']
  #allocation1 [shape = 'u32[72,128]{1,0:T(1,128)}', space=vmem, size = 0x9000, scoped, tag = 'internal scratch']
  #allocation2 [shape = 'f32[8,1]{1,0:T(8,128)}', space=vmem, size = 0x1000, scoped, tag = 'scratch operand']
  #allocation3 [shape = 'f32[8,1]{1,0:T(8,128)}', space=vmem, size = 0x1000, scoped, tag = 'scratch operand']
  %s0 = inlined_call_operand.vmem [shape: f32[16,32], index: 0, kind: input, shape index: {}]
  %s1 = inlined_call_operand.vmem [shape: f32[16,32], index: 1, kind: input, shape index: {}]
  %s2 = inlined_call_operand.hbm [shape: f32[16,32], index: 2, kind: input, shape index: {}]
  %s3 = inlined_call_operand.vmem [shape: f32[32,2], index: 3, kind: input, shape index: {}]
  %s4 = inlined_call_operand.vmem [shape: f32[2], index: 4, kind: input, shape index: {}]
  %s5 = inlined_call_operand.hbm [shape: f32[16,32], index: 5, kind: output, shape index: {}]
  %s6 = sld [smem:[#allocation0]]
  $region65: #{tpu_custom_call.1} parent=0
    _
  %s8 = ssub.s32 1, %s6
  %s9 = scalar_select 0, %s8, %s6
  $region1: #{tpu_custom_call.1} parent=0
    #allocation4 [shape = 'u8[8192]{0}', space=vmem, size = 0x2000, scoped, tag = 'input window, operand 2']
    #allocation5 [shape = 's32[2]{0}', space=sflag, size = 0x8, scoped, tag = 'scoped memory for tpu_custom_call.1']
    #allocation6 [shape = 's32[2]{0}', space=sflag, size = 0x8, scoped, tag = 'scoped memory for tpu_custom_call.1']
    #allocation7 [shape = 's32[2]{0}', space=sflag, size = 0x8, scoped, tag = 'scoped memory for tpu_custom_call.1']
    #allocation8 [shape = 'u8[512]{0}', space=smem, size = 0x200, scoped, tag = 'input window, operand 4, single buffered']
    #allocation9 [shape = 'u8[8192]{0}', space=vmem, size = 0x2000, scoped, tag = 'output window, operand 0']
    %10 = vsyncpa [#allocation5], 0
    %s11 = scalar_lea.sflag [#allocation5], 1
    %12 = vsyncpa %s11, 0
    %13 = vsyncpa [#allocation7], 0
    %14 = vsyncpa [#allocation6], 0
    %s15 = scalar_lea.sflag [#allocation6], 1
    %16 = vsyncpa %s15, 0
    loop: start=0, step=1, limit=4
    $region2: #{tpu_custom_call.1} parent=1 // loop_pre_header
      _
    $region3: #{tpu_custom_call.1} parent=1 // loop_header
      %s18 = sphi 0, %s22
      %p19 = scmp.ge.s32.totalorder %s18, 4
      %s25 = sphi 0, %s37
      %s26 = sphi 0, %s33
      %s27 = sphi 0, %s25
      %s28 = sphi 0, %s26
      %s29 = sphi 0, %s27
      %s30 = sphi 0, %s28
      %s40 = sphi 0, %s42
      %s43 = sphi 0, %s40
      %s44 = sphi 0, %s43
      %s60 = sphi 0, %s44
      %s68 = sphi 0, %s70
      %s71 = sphi 0, %s68
      %s72 = sphi 0, %s71
      %s88 = sphi 0, %s72
      %s96 = sphi 0, %s98
      %s99 = sphi 0, %s96
      %s100 = sphi 0, %s99
      %s116 = sphi 0, %s100
      %s120 = sphi 0, %s120
      %s122 = sphi 0, %s120
      %s123 = sphi 0, %s122
      %s137 = sphi 0, %s123
      %s141 = sphi 0, %s141
      %s143 = sphi 0, %s141
      %s144 = sphi 0, %s143
      %s158 = sphi 0, %s144
      %s166 = sphi 0, %s168
      %s169 = sphi 0, %s166
      %s170 = sphi 0, %s169
      %s186 = sphi 0, %s170
    $region4: #{tpu_custom_call.1} parent=1 // loop_header_branch
      %21 = sbr.rel (%p19) target = $region8
    $region5: #{tpu_custom_call.1} parent=1 // loop_body
      %s23 = ssub.s32 %s18, 1
      %s24 = ssub.s32 %s18, 2
      %s31 = sadd.s32 1, %s26
      %p32 = scmp.ge.s32.totalorder %s31, 1
      %s33 = scalar_select %p32, 0, %s31
      %s34 = sadd.s32 1, %s25
      %s35 = scalar_select %p32, %s34, %s25
      %p36 = scmp.ge.s32.totalorder %s35, 2
      %s37 = scalar_select %p36, 0, %s35
      %s38 = ssub.s32 %s25, %s37
      %p39 = scmp.eq.s32.totalorder %s38, 0
      %s41 = sadd.s32 %s40, 1
      %s42 = scalar_select %p39, %s40, %s41
      %p45 = pneg %p39
      %p46 = scmp.eq.s32.totalorder %s18, 1
      %p47 = por %p45, %p46
      %p48 = scmp.ne.s32.totalorder %s40, %s43
      %p49 = scmp.eq.s32.totalorder %s18, 0
      %p50 = por %p48, %p49
      %p51 = scmp.ne.s32.totalorder %s40, %s43
      %p52 = scmp.eq.s32.totalorder %s23, 1
      %p53 = por %p51, %p52
      %p54 = scmp.ne.s32.totalorder %s43, %s44
      %p55 = scmp.eq.s32.totalorder %s23, 0
      %p56 = por %p54, %p55
      %p57 = scmp.ne.s32.totalorder %s43, %s44
      %p58 = scmp.eq.s32.totalorder %s24, 1
      %p59 = por %p57, %p58
      %p61 = scmp.ne.s32.totalorder %s44, %s60
      %p62 = scmp.eq.s32.totalorder %s24, 0
      %p63 = por %p61, %p62
      %s64 = ssub.s32 %s25, %s37
      %s65 = ssub.s32 %s26, %s33
      %s66 = sor.u32 %s64, %s65
      %p67 = scmp.eq.s32.totalorder %s66, 0
      %s69 = sadd.s32 %s68, 1
      %s70 = scalar_select %p67, %s68, %s69
      %p73 = pneg %p67
      %p74 = scmp.eq.s32.totalorder %s18, 1
      %p75 = por %p73, %p74
      %p76 = scmp.ne.s32.totalorder %s68, %s71
      %p77 = scmp.eq.s32.totalorder %s18, 0
      %p78 = por %p76, %p77
      %p79 = scmp.ne.s32.totalorder %s68, %s71
      %p80 = scmp.eq.s32.totalorder %s23, 1
      %p81 = por %p79, %p80
      %p82 = scmp.ne.s32.totalorder %s71, %s72
      %p83 = scmp.eq.s32.totalorder %s23, 0
      %p84 = por %p82, %p83
      %p85 = scmp.ne.s32.totalorder %s71, %s72
      %p86 = scmp.eq.s32.totalorder %s24, 1
      %p87 = por %p85, %p86
      %p89 = scmp.ne.s32.totalorder %s72, %s88
      %p90 = scmp.eq.s32.totalorder %s24, 0
      %p91 = por %p89, %p90
      %s92 = ssub.s32 %s25, %s37
      %s93 = ssub.s32 %s26, %s33
      %s94 = sor.u32 %s92, %s93
      %p95 = scmp.eq.s32.totalorder %s94, 0
      %s97 = sadd.s32 %s96, 1
      %s98 = scalar_select %p95, %s96, %s97
      %p101 = pneg %p95
      %p102 = scmp.eq.s32.totalorder %s18, 1
      %p103 = por %p101, %p102
      %p104 = scmp.ne.s32.totalorder %s96, %s99
      %p105 = scmp.eq.s32.totalorder %s18, 0
      %p106 = por %p104, %p105
      %p107 = scmp.ne.s32.totalorder %s96, %s99
      %p108 = scmp.eq.s32.totalorder %s23, 1
      %p109 = por %p107, %p108
      %p110 = scmp.ne.s32.totalorder %s99, %s100
      %p111 = scmp.eq.s32.totalorder %s23, 0
      %p112 = por %p110, %p111
      %p113 = scmp.ne.s32.totalorder %s99, %s100
      %p114 = scmp.eq.s32.totalorder %s24, 1
      %p115 = por %p113, %p114
      %p117 = scmp.ne.s32.totalorder %s100, %s116
      %p118 = scmp.eq.s32.totalorder %s24, 0
      %p119 = por %p117, %p118
      %s121 = sadd.s32 %s120, 1
      %p124 = scmp.eq.s32.totalorder %s18, 1
      %p125 = scmp.ne.s32.totalorder %s120, %s122
      %p126 = scmp.eq.s32.totalorder %s18, 0
      %p127 = por %p125, %p126
      %p128 = scmp.ne.s32.totalorder %s120, %s122
      %p129 = scmp.eq.s32.totalorder %s23, 1
      %p130 = por %p128, %p129
      %p131 = scmp.ne.s32.totalorder %s122, %s123
      %p132 = scmp.eq.s32.totalorder %s23, 0
      %p133 = por %p131, %p132
      %p134 = scmp.ne.s32.totalorder %s122, %s123
      %p135 = scmp.eq.s32.totalorder %s24, 1
      %p136 = por %p134, %p135
      %p138 = scmp.ne.s32.totalorder %s123, %s137
      %p139 = scmp.eq.s32.totalorder %s24, 0
      %p140 = por %p138, %p139
      %s142 = sadd.s32 %s141, 1
      %p145 = scmp.eq.s32.totalorder %s18, 1
      %p146 = scmp.ne.s32.totalorder %s141, %s143
      %p147 = scmp.eq.s32.totalorder %s18, 0
      %p148 = por %p146, %p147
      %p149 = scmp.ne.s32.totalorder %s141, %s143
      %p150 = scmp.eq.s32.totalorder %s23, 1
      %p151 = por %p149, %p150
      %p152 = scmp.ne.s32.totalorder %s143, %s144
      %p153 = scmp.eq.s32.totalorder %s23, 0
      %p154 = por %p152, %p153
      %p155 = scmp.ne.s32.totalorder %s143, %s144
      %p156 = scmp.eq.s32.totalorder %s24, 1
      %p157 = por %p155, %p156
      %p159 = scmp.ne.s32.totalorder %s144, %s158
      %p160 = scmp.eq.s32.totalorder %s24, 0
      %p161 = por %p159, %p160
      %s162 = ssub.s32 %s25, %s37
      %s163 = ssub.s32 %s26, %s33
      %s164 = sor.u32 %s162, %s163
      %p165 = scmp.eq.s32.totalorder %s164, 0
      %s167 = sadd.s32 %s166, 1
      %s168 = scalar_select %p165, %s166, %s167
      %p171 = pneg %p165
      %p172 = scmp.eq.s32.totalorder %s18, 1
      %p173 = por %p171, %p172
      %p174 = scmp.ne.s32.totalorder %s166, %s169
      %p175 = scmp.eq.s32.totalorder %s18, 0
      %p176 = por %p174, %p175
      %p177 = scmp.ne.s32.totalorder %s166, %s169
      %p178 = scmp.eq.s32.totalorder %s23, 1
      %p179 = por %p177, %p178
      %p180 = scmp.ne.s32.totalorder %s169, %s170
      %p181 = scmp.eq.s32.totalorder %s23, 0
      %p182 = por %p180, %p181
      %p183 = scmp.ne.s32.totalorder %s169, %s170
      %p184 = scmp.eq.s32.totalorder %s24, 1
      %p185 = por %p183, %p184
      %p187 = scmp.ne.s32.totalorder %s170, %s186
      %p188 = scmp.eq.s32.totalorder %s24, 0
      %p189 = por %p187, %p188
      %p190 = scmp.le.s32.totalorder 1, %s18
      %p191 = scmp.lt.s32.totalorder %s18, 3
      %p192 = pnand %p190, %p191
      %p193 = pneg %p192
      // Predicated region
      $region9: #{tpu_custom_call.1} parent=5 // pred_check
        _
      $region10: #{tpu_custom_call.1} parent=5 // pred_check_branch
        %195 = sbr.rel (%p192) target = $region12
      $region11: #{tpu_custom_call.1} parent=5 // pred_region
        %s196 = ssub.s32 %s18, 1
        // Predicated region
        $region13: #{tpu_custom_call.1} parent=11 // pred_check
          %p197 = pneg %p133
        $region14: #{tpu_custom_call.1} parent=11 // pred_check_branch
          %199 = sbr.rel (%p197) target = $region16
        $region15: #{tpu_custom_call.1} parent=11 // pred_region
          _
        $region16: #{tpu_custom_call.1} parent=11 // pred_fallthru
          _
        // Predicated region
        $region17: #{tpu_custom_call.1} parent=11 // pred_check
          %p200 = pneg %p154
        $region18: #{tpu_custom_call.1} parent=11 // pred_check_branch
          %202 = sbr.rel (%p200) target = $region20
        $region19: #{tpu_custom_call.1} parent=11 // pred_region
          %204 = vsyncadd [#allocation7], 0
          %s206 = sshll.u32 %s4, 4
          %s207 = int_to_ptr.vmem [resolvable:$true] %s206
          %209 = dma.vmem_to_smem %s207, 16, [#allocation8], [#allocation7]
        $region20: #{tpu_custom_call.1} parent=11 // pred_fallthru
          _
      $region12: #{tpu_custom_call.1} parent=5 // pred_fallthru
        _
      %p210 = scmp.lt.s32.totalorder %s18, 2
      // Predicated region
      $region21: #{tpu_custom_call.1} parent=5 // pred_check
        %p211 = pneg %p210
      $region22: #{tpu_custom_call.1} parent=5 // pred_check_branch
        %213 = sbr.rel (%p211) target = $region24
      $region23: #{tpu_custom_call.1} parent=5 // pred_region
        // Predicated region
        $region25: #{tpu_custom_call.1} parent=23 // pred_check
          %p214 = pneg %p50
        $region26: #{tpu_custom_call.1} parent=23 // pred_check_branch
          %216 = sbr.rel (%p214) target = $region28
        $region27: #{tpu_custom_call.1} parent=23 // pred_region
          %p217 = scmp.lt.s32.totalorder %s25, 1
          %s218 = scalar_select %p217, %s25, 1
          %s219 = smul.addr %s218, 8
          %s220 = scalar_lea.vmem %s0, %s219
        $region28: #{tpu_custom_call.1} parent=23 // pred_fallthru
          _
        // Predicated region
        $region29: #{tpu_custom_call.1} parent=23 // pred_check
          %p221 = pneg %p78
        $region30: #{tpu_custom_call.1} parent=23 // pred_check_branch
          %223 = sbr.rel (%p221) target = $region32
        $region31: #{tpu_custom_call.1} parent=23 // pred_region
          %p224 = scmp.lt.s32.totalorder %s25, 1
          %s225 = scalar_select %p224, %s25, 1
          %p226 = scmp.lt.s32.totalorder %s26, 0
          %s227 = scalar_select %p226, %s26, 0
          %s228 = sadd.s32 %s227, %s225
          %s229 = smul.addr %s228, 8
          %s230 = scalar_lea.vmem %s1, %s229
        $region32: #{tpu_custom_call.1} parent=23 // pred_fallthru
          _
        // Predicated region
        $region33: #{tpu_custom_call.1} parent=23 // pred_check
          %p231 = pneg %p106
        $region34: #{tpu_custom_call.1} parent=23 // pred_check_branch
          %233 = sbr.rel (%p231) target = $region36
        $region35: #{tpu_custom_call.1} parent=23 // pred_region
          %s234 = sand.u32 %s96, 1
          %s235 = scalar_lea.sflag [#allocation5], %s234
          %s236 = sand.u32 %s96, 1
          %s237 = smul.addr %s236, 8
          %s238 = scalar_lea.vmem [#allocation4], %s237
          %240 = vsyncadd %s235, 0
          %s241 = sadd.s32 %s26, %s25
          %s242 = smul.addr %s241, 8
          %s243 = scalar_lea.hbm %s2, %s242
          %s245 = sshll.u32 %s243, 4
          %s246 = int_to_ptr.hbm [resolvable:$true] %s245
          %s247 = sshll.u32 %s238, 4
          %s248 = int_to_ptr.vmem [resolvable:$true] %s247
          %250 = dma.hbm_to_vmem [thread:$0]  %s246, 128, %s248, %s235
        $region36: #{tpu_custom_call.1} parent=23 // pred_fallthru
          _
      $region24: #{tpu_custom_call.1} parent=5 // pred_fallthru
        _
      %p251 = scmp.le.s32.totalorder 1, %s18
      %p252 = scmp.lt.s32.totalorder %s18, 3
      %p253 = pnand %p251, %p252
      %p254 = pneg %p253
      // Predicated region
      $region37: #{tpu_custom_call.1} parent=5 // pred_check
        _
      $region38: #{tpu_custom_call.1} parent=5 // pred_check_branch
        %256 = sbr.rel (%p253) target = $region40
      $region39: #{tpu_custom_call.1} parent=5 // pred_region
        %s257 = ssub.s32 %s18, 1
        %s258 = sand.u32 %s99, 1
        %s259 = scalar_lea.sflag [#allocation5], %s258
        %s260 = sand.u32 %s99, 1
        %s261 = smul.addr %s260, 8
        %s262 = scalar_lea.vmem [#allocation4], %s261
        // Predicated region
        $region41: #{tpu_custom_call.1} parent=39 // pred_check
          %p263 = pneg %p112
        $region42: #{tpu_custom_call.1} parent=39 // pred_check_branch
          %265 = sbr.rel (%p263) target = $region44
        $region43: #{tpu_custom_call.1} parent=39 // pred_region
          %267 = dma.done %s259, 128
        $region44: #{tpu_custom_call.1} parent=39 // pred_fallthru
          _
        // Predicated region
        $region45: #{tpu_custom_call.1} parent=39 // pred_check
          %p268 = pneg %p154
        $region46: #{tpu_custom_call.1} parent=39 // pred_check_branch
          %270 = sbr.rel (%p268) target = $region48
        $region47: #{tpu_custom_call.1} parent=39 // pred_region
          %272 = dma.done [#allocation7], 16
        $region48: #{tpu_custom_call.1} parent=39 // pred_fallthru
          _
        %273 = sfence
        %p274 = scmp.lt.s32.totalorder %s27, 1
        %s275 = scalar_select %p274, %s27, 1
        %s276 = smul.addr %s275, 8
        %s277 = scalar_lea.vmem %s0, %s276
        %p278 = pneg %p56
        %p279 = pneg %p53
        %p280 = scmp.lt.s32.totalorder %s27, 1
        %s281 = scalar_select %p280, %s27, 1
        %p282 = scmp.lt.s32.totalorder %s28, 0
        %s283 = scalar_select %p282, %s28, 0
        %s284 = sadd.s32 %s283, %s281
        %s285 = smul.addr %s284, 8
        %s286 = scalar_lea.vmem %s1, %s285
        %p287 = pneg %p84
        %p288 = pneg %p81
        %s289 = sand.u32 %s99, 1
        %s290 = scalar_lea.sflag [#allocation5], %s289
        %s291 = sand.u32 %s99, 1
        %s292 = smul.addr %s291, 8
        %s293 = scalar_lea.vmem [#allocation4], %s292
        %p294 = pneg %p112
        %p295 = pneg %p109
        %p296 = pneg %p133
        %p297 = pneg %p130
        %p298 = pneg %p154
        %p299 = pneg %p151
        %p300 = pneg %p182
        %p301 = pneg %p179
        %s302 = sand.u32 %s169, 1
        %s303 = scalar_lea.sflag [#allocation6], %s302
        %s304 = sand.u32 %s169, 1
        %s305 = smul.addr %s304, 8
        %s306 = scalar_lea.vmem [#allocation9], %s305
        %p307 = scmp.lt.s32.totalorder %s27, 1
        %s308 = scalar_select %p307, %s27, 1
        %s309 = smul.addr %s308, 8
        %s310 = scalar_lea.vmem %s0, %s309
        %p311 = scmp.lt.s32.totalorder %s27, 1
        %s312 = scalar_select %p311, %s27, 1
        %p313 = scmp.lt.s32.totalorder %s28, 0
        %s314 = scalar_select %p313, %s28, 0
        %s315 = sadd.s32 %s314, %s312
        %s316 = smul.addr %s315, 8
        %s317 = scalar_lea.vmem %s1, %s316
        %p318 = scmp.eq.s32.totalorder %s28, 0
        // Predicated region
        $region49: #{tpu_custom_call.1} parent=39 // pred_check
          %p319 = pneg %p318
        $region50: #{tpu_custom_call.1} parent=39 // pred_check_branch
          %321 = sbr.rel (%p319) target = $region52
        $region51: #{tpu_custom_call.1} parent=39 // pred_region
          %v322 = vld [vmem:[%s310] sm:$0xff]
          %v323 = vld [vmem:[%s3] sm:$0xff]
          %v324 = vld [vmem:[%s3 + $0x8] sm:$0xff]
          %v325 = vld [vmem:[%s3 + $0x10] sm:$0xff]
          %v326 = vld [vmem:[%s3 + $0x18] sm:$0xff]
          %vm327 = vcmask 261120
          %v329 = vsel %vm327, %v322, 0
          %331 = vmatpush.msra.mxu0 0.0
          %332 = vmatpush.msra.mxu0 0.0
          %333 = vmatpush.msra.mxu0 0.0
          %334 = vmatpush.msra.mxu0 0.0
          %335 = vmatpush.msra.mxu0 0.0
          %336 = vmatpush.msra.mxu0 0.0
          %337 = vmatpush.msra.mxu0 0.0
          %338 = vmatpush.msra.mxu0 0.0
          %339 = vmatpush.msra.mxu0 0.0
          %340 = vmatpush.msra.mxu0 0.0
          %341 = vmatpush.msra.mxu0 0.0
          %342 = vmatpush.msra.mxu0 0.0
          %343 = vmatpush.msra.mxu0 %v326
          %344 = vmatpush.msra.mxu0 %v325
          %345 = vmatpush.msra.mxu0 %v324
          %346 = vmatpush.msra.mxu0 %v323
          %347 = vmatmul.f32.gmra.mxu0 %v329
          %v348 = vpop.f32.mrf.mxu0
          %v349 = vadd.f32 0.0, %v348
          %350 = vdwg.mxu0
          %s351 = sld [smem:[#allocation8]]
          %v352 = vstv %s351
          %v353 = vadd.f32 %v349, %v352
          %v354 = vtanh.pop %v353
          %vm355 = vcmask 7168
          %356 = vst.msk [vmem:[#allocation2] sm:$0xff] %vm355, %v354
          %s357 = sld [smem:[#allocation8 + $0x1]]
          %v358 = vstv %s357
          %v359 = vadd.f32 %v349, %v358
          %v360 = vtanh.pop %v359
          %362 = vrot.lane.b32.xlu0 %v360, 127
          %v363 = vpop.permute.xlu0 %362
          %365 = vst.msk [vmem:[#allocation3] sm:$0xff] %vm355, %v363
        $region52: #{tpu_custom_call.1} parent=39 // pred_fallthru
          _
        %v366 = vld [vmem:[#allocation2] sm:$0xff]
        %v367 = vld [vmem:[#allocation3] sm:$0xff]
        %v368 = vld [vmem:[%s317] sm:$0xff]
        %370 = vset.pattern.permute.xlu0 0
        %371 = vperm.xlu0 %370, %v366
        %v372 = vpop.permute.xlu0 %371
        %v374 = vmul.f32 %v372, %v368
        %v375 = vld [vmem:[%s262] sm:$0xff]
        %377 = vset.pattern.permute.xlu0 0
        %378 = vperm.xlu0 %377, %v367
        %v379 = vpop.permute.xlu0 %378
        %v381 = vmul.f32 %v379, %v375
        %v382 = vadd.f32 %v374, %v381
        %383 = vst [vmem:[%s306] sm:$0xff] %v382
        %s384 = sand.u32 %s169, 1
        %s385 = scalar_lea.sflag [#allocation6], %s384
        %s386 = sand.u32 %s169, 1
        %s387 = smul.addr %s386, 8
        %s388 = scalar_lea.vmem [#allocation9], %s387
        // Predicated region
        $region53: #{tpu_custom_call.1} parent=39 // pred_check
          %p389 = pneg %p179
        $region54: #{tpu_custom_call.1} parent=39 // pred_check_branch
          %391 = sbr.rel (%p389) target = $region56
        $region55: #{tpu_custom_call.1} parent=39 // pred_region
          %393 = vsyncadd %s385, 0
          %s394 = sadd.s32 %s28, %s27
          %s395 = smul.addr %s394, 8
          %s396 = scalar_lea.hbm %s5, %s395
          %s398 = sshll.u32 %s388, 4
          %s399 = int_to_ptr.vmem [resolvable:$true] %s398
          %s400 = sshll.u32 %s396, 4
          %s401 = int_to_ptr.hbm [resolvable:$true] %s400
          %403 = dma.vmem_to_hbm [thread:$0]  %s399, 128, %s401, %s385
        $region56: #{tpu_custom_call.1} parent=39 // pred_fallthru
          _
      $region40: #{tpu_custom_call.1} parent=5 // pred_fallthru
        _
      %p404 = scmp.le.s32.totalorder 2, %s18
      // Predicated region
      $region57: #{tpu_custom_call.1} parent=5 // pred_check
        %p405 = pneg %p404
      $region58: #{tpu_custom_call.1} parent=5 // pred_check_branch
        %407 = sbr.rel (%p405) target = $region60
      $region59: #{tpu_custom_call.1} parent=5 // pred_region
        %s408 = ssub.s32 %s18, 2
        // Predicated region
        $region61: #{tpu_custom_call.1} parent=59 // pred_check
          %p409 = pneg %p185
        $region62: #{tpu_custom_call.1} parent=59 // pred_check_branch
          %411 = sbr.rel (%p409) target = $region64
        $region63: #{tpu_custom_call.1} parent=59 // pred_region
          %s412 = sand.u32 %s170, 1
          %s413 = scalar_lea.sflag [#allocation6], %s412
          %s414 = sand.u32 %s170, 1
          %s415 = smul.addr %s414, 8
          %s416 = scalar_lea.vmem [#allocation9], %s415
          %418 = dma.done %s413, 128
        $region64: #{tpu_custom_call.1} parent=59 // pred_fallthru
          _
      $region60: #{tpu_custom_call.1} parent=5 // pred_fallthru
        _
    $region6: #{tpu_custom_call.1} parent=1 // loop_footer
      %s22 = sadd.s32 1, %s18
    $region7: #{tpu_custom_call.1} parent=1 // loop_footer_branch
      %17 = sbr.rel target = $region3
    $region8: #{tpu_custom_call.1} parent=1 // loop_exit
      _
    %419 = vsyncpa [#allocation5], 1
    %s420 = scalar_lea.sflag [#allocation5], 1
    %421 = vsyncpa %s420, 1
    %422 = vsyncpa [#allocation6], 1
    %s423 = scalar_lea.sflag [#allocation6], 1
    %424 = vsyncpa %s423, 1
    %425 = vsyncpa [#allocation7], 1
    %s426 = scalar_lea.sflag [#allocation7], 1
    %427 = vsyncpa %s426, 1

</llo_original>
